<compile_context>
chip_gen: v7x
topology: tpu7x:2x2x1
jax: 0.10.0
libtpu: 0.0.40
codegen_flags: <defaults>
</compile_context>

<pallas_src>
import functools

import jax
import jax.numpy as jnp
from jax.experimental import pallas as pl
from jax.experimental.pallas import tpu as pltpu


# ----------------------------- fused kernel ---------------------------------

def _fused_cheby_kernel(x_ref, lhat_ref, w_ref, b_ref, o_ref, *, num_layers):
    """All ChebConv(K=2) layers fused; everything resident in VMEM.

    x_ref    : (Np, Fp)            padded node features (f32)
    lhat_ref : (Np, Np)            padded scaled Laplacian (compute dtype)
    w_ref    : (L, 2*Fp, Fp)       per-layer stacked [W0; W1] (compute dtype)
    b_ref    : (L, 1, Fp)          per-layer bias (f32)
    o_ref    : (Np, Fp)            padded output logits (f32)
    """
    lhat = lhat_ref[...]                                   # (Np, Np)
    h = x_ref[...].astype(jnp.float32)                     # (Np, Fp) f32

    for layer in range(num_layers):                        # static unrolled loop
        w = w_ref[layer]                                   # (2*Fp, Fp)
        hc = h.astype(w.dtype)                             # operands in compute dtype
        # T_1 term propagation: Lhat @ h  (MXU, f32 accumulation)
        lx = jnp.dot(lhat, hc, preferred_element_type=jnp.float32)
        # Stack the two Theta matmuls into one MXU call: [h | Lhat@h] @ [W0; W1]
        cat = jnp.concatenate([hc, lx.astype(w.dtype)], axis=-1)   # (Np, 2*Fp)
        out = jnp.dot(cat, w, preferred_element_type=jnp.float32)  # (Np, Fp) f32
        out = out + b_ref[layer]                           # bias broadcast (f32)
        if layer != num_layers - 1:
            out = jnp.maximum(out, 0.0)                    # ReLU (f32 epilogue)
        h = out

    o_ref[...] = h.astype(o_ref.dtype)                     # lane-dense (Np, 128k) store


def _round_up(x, m):
    return (x + m - 1) // m * m


def cheby_forward_fused(x, lhat, params, *, compute_dtype=jnp.float32):
    """Fused eval-mode forward of Cheby: stack of ChebConv(K=2) + ReLU."""
    n, f_in = x.shape
    num_layers = len(params)
    dims = [f_in] + [w0.shape[1] for (w0, _, _) in params]
    fpad = _round_up(max(dims), 128)         # lane-dense feature dim
    npad = _round_up(n, 8)                   # sublane-aligned node dim

    # Zero-padding is exact: padded feature columns of h stay 0, padded weight
    # rows/cols and bias entries are 0, padded Lhat rows/cols are 0.
    xp = jnp.zeros((npad, fpad), jnp.float32).at[:n, :f_in].set(x)
    lp = jnp.zeros((npad, npad), jnp.float32).at[:n, :n].set(lhat)
    lp = lp.astype(compute_dtype)

    w_all, b_all = [], []
    for (w0, w1, b) in params:
        fi, fo = w0.shape
        wstack = jnp.zeros((2 * fpad, fpad), jnp.float32)
        wstack = wstack.at[:fi, :fo].set(w0)
        wstack = wstack.at[fpad:fpad + fi, :fo].set(w1)
        w_all.append(wstack)
        b_all.append(jnp.zeros((1, fpad), jnp.float32).at[:, :fo].set(
            b.reshape(1, -1)))
    w_all = jnp.stack(w_all).astype(compute_dtype)         # (L, 2*Fp, Fp)
    b_all = jnp.stack(b_all)                               # (L, 1, Fp) f32

    kernel = functools.partial(_fused_cheby_kernel, num_layers=num_layers)
    out_pad = pl.pallas_call(
        kernel,
        out_shape=jax.ShapeDtypeStruct((npad, fpad), jnp.float32),
        grid_spec=pltpu.PrefetchScalarGridSpec(
            num_scalar_prefetch=0,
            grid=(1,),   # whole problem is resident; single grid step
            in_specs=[
                pl.BlockSpec((npad, fpad), lambda i: (0, 0)),               # X
                pl.BlockSpec((npad, npad), lambda i: (0, 0)),               # Lhat
                pl.BlockSpec((num_layers, 2 * fpad, fpad),
                             lambda i: (0, 0, 0)),                          # [W0;W1] stack
                pl.BlockSpec((num_layers, 1, fpad), lambda i: (0, 0, 0)),   # biases
            ],
            out_specs=pl.BlockSpec((npad, fpad), lambda i: (0, 0)),
        ),
        compiler_params=pltpu.CompilerParams(
            dimension_semantics=("arbitrary",)),
    )(xp, lp, w_all, b_all)

    return out_pad[:n, :dims[-1]]


# ----------------------------- glue / setup ---------------------------------

def glorot(key, shape):
    fan_in, fan_out = shape
    limit = jnp.sqrt(6.0 / (fan_in + fan_out))
    return jax.random.uniform(key, shape, jnp.float32, -limit, limit)


def make_params(key, num_feats, dim_hidden, num_classes, num_layers):
    dims = ([num_feats] + [dim_hidden] * (num_layers - 1) + [num_classes]
            if num_layers >= 2 else [num_feats, num_classes])
    params = []
    for i in range(num_layers):
        key, k0, k1 = jax.random.split(key, 3)
        fin, fout = dims[i], dims[i + 1]
        w0 = glorot(k0, (fin, fout))
        w1 = glorot(k1, (fin, fout))
        b = jnp.zeros((1, fout), jnp.float32)
        params.append((w0, w1, b))
    return params


def make_graph(key, n_nodes, n_rand_edges):
    # Ring edges (deg > 0 everywhere) + random edges, symmetric, no self-loops.
    ring_src = jnp.arange(n_nodes)
    ring_dst = (ring_src + 1) % n_nodes
    k1, k2 = jax.random.split(key)
    rnd_src = jax.random.randint(k1, (n_rand_edges,), 0, n_nodes)
    rnd_dst = jax.random.randint(k2, (n_rand_edges,), 0, n_nodes)
    src = jnp.concatenate([ring_src, rnd_src])
    dst = jnp.concatenate([ring_dst, rnd_dst])
    a = jnp.zeros((n_nodes, n_nodes), jnp.float32).at[src, dst].set(1.0)
    a = jnp.maximum(a, a.T)
    a = a * (1.0 - jnp.eye(n_nodes, dtype=jnp.float32))
    deg = a.sum(axis=1)
    d_inv_sqrt = jnp.where(deg > 0, 1.0 / jnp.sqrt(deg), 0.0)
    # Lhat = 2L/lambda_max - I  with lambda_max=2  ->  -D^{-1/2} A D^{-1/2}
    return -(d_inv_sqrt[:, None] * a * d_inv_sqrt[None, :])


def reference_forward(x, lhat, params):
    h = x
    for i, (w0, w1, b) in enumerate(params):
        h = h @ w0 + (lhat @ h) @ w1 + b
        if i != len(params) - 1:
            h = jnp.maximum(h, 0.0)
    return h


if __name__ == "__main__":
    # Small config: num_feats=16, dim_hidden=32, num_classes=8, num_layers=3, N=64.
    N, NUM_FEATS, DIM_HIDDEN, NUM_CLASSES, NUM_LAYERS = 64, 16, 32, 8, 3

    key = jax.random.PRNGKey(0)
    k_x, k_g, k_p = jax.random.split(key, 3)

    x = jax.random.normal(k_x, (N, NUM_FEATS), jnp.float32)
    lhat = make_graph(k_g, N, n_rand_edges=128)
    params = make_params(k_p, NUM_FEATS, DIM_HIDDEN, NUM_CLASSES, NUM_LAYERS)

    ref = reference_forward(x, lhat, params)

    # f32 operand path: strict check against the JAX reference.
    out = cheby_forward_fused(x, lhat, params, compute_dtype=jnp.float32)
    out = jax.block_until_ready(out)
    assert out.shape == (N, NUM_CLASSES)
    assert jnp.allclose(out, ref, atol=1e-3, rtol=1e-3), "f32 mismatch vs reference"

    # bf16 operand path (f32 accumulation): halves Lhat/weight bytes at scale.
    out_bf16 = cheby_forward_fused(x, lhat, params, compute_dtype=jnp.bfloat16)
    out_bf16 = jax.block_until_ready(out_bf16)
    assert out_bf16.shape == (N, NUM_CLASSES)
    assert jnp.allclose(out_bf16, ref, atol=1.5e-1, rtol=1e-1), \
        "bf16 sanity mismatch vs reference"

    print("KERNEL_OK")
</pallas_src>

<mosaic_0001>
module attributes {stable_mosaic.version = 11 : i64} {
  func.func @_fused_cheby_kernel(%arg0: i32, %arg1: memref<64x128xf32, #tpu.memory_space<vmem>>, %arg2: memref<64x64xf32, #tpu.memory_space<vmem>>, %arg3: memref<3x256x128xf32, #tpu.memory_space<vmem>>, %arg4: memref<3x1x128xf32, #tpu.memory_space<vmem>>, %arg5: memref<64x128xf32, #tpu.memory_space<vmem>>) attributes {dimension_semantics = [#tpu.dimension_semantics<arbitrary>], iteration_bounds = array<i64: 1>, scalar_prefetch = 0 : i64, scratch_operands = 0 : i64, tpu.core_type = #tpu.core_type<tc>, window_params = [{pipeline_mode = #tpu.pipeline_mode<synchronous>, transform_indices = @transform_0, window_bounds = array<i64: 64, 128>}, {pipeline_mode = #tpu.pipeline_mode<synchronous>, transform_indices = @transform_1, window_bounds = array<i64: 64, 64>}, {pipeline_mode = #tpu.pipeline_mode<synchronous>, transform_indices = @transform_2, window_bounds = array<i64: 3, 256, 128>}, {pipeline_mode = #tpu.pipeline_mode<synchronous>, transform_indices = @transform_3, window_bounds = array<i64: 3, 1, 128>}, {pipeline_mode = #tpu.pipeline_mode<synchronous>, transform_indices = @transform_4, window_bounds = array<i64: 64, 128>}]} {
    %c0 = arith.constant 0 : index
    %c0_0 = arith.constant 0 : index
    %0 = vector.load %arg2[%c0, %c0_0] : memref<64x64xf32, #tpu.memory_space<vmem>>, vector<64x64xf32>
    %c0_1 = arith.constant 0 : index
    %c0_2 = arith.constant 0 : index
    %1 = vector.load %arg1[%c0_1, %c0_2] : memref<64x128xf32, #tpu.memory_space<vmem>>, vector<64x128xf32>
    %c0_3 = arith.constant 0 : index
    %c0_4 = arith.constant 0 : index
    %c0_5 = arith.constant 0 : index
    %2 = vector.load %arg3[%c0_3, %c0_4, %c0_5] : memref<3x256x128xf32, #tpu.memory_space<vmem>>, vector<1x256x128xf32>
    %3 = vector.shape_cast %2 : vector<1x256x128xf32> to vector<256x128xf32>
    %cst = arith.constant dense<0.000000e+00> : vector<64x128xf32>
    %4 = tpu.matmul %0, %1, %cst {dimension_numbers = #tpu.dot_dimension_numbers<[1], [0], [0], [1], [0, 0, 1, 1], [], []>} : vector<64x64xf32>, vector<64x128xf32>, vector<64x128xf32> -> vector<64x128xf32>
    %5 = tpu.concatenate %1, %4 in 1 : vector<64x128xf32>, vector<64x128xf32> -> vector<64x256xf32>
    %cst_6 = arith.constant dense<0.000000e+00> : vector<64x128xf32>
    %6 = tpu.matmul %5, %3, %cst_6 {dimension_numbers = #tpu.dot_dimension_numbers<[1], [0], [0], [1], [0, 0, 1, 1], [], []>} : vector<64x256xf32>, vector<256x128xf32>, vector<64x128xf32> -> vector<64x128xf32>
    %c0_7 = arith.constant 0 : index
    %c0_8 = arith.constant 0 : index
    %c0_9 = arith.constant 0 : index
    %7 = vector.load %arg4[%c0_7, %c0_8, %c0_9] : memref<3x1x128xf32, #tpu.memory_space<vmem>>, vector<1x1x128xf32>
    %8 = vector.shape_cast %7 : vector<1x1x128xf32> to vector<1x128xf32>
    %9 = vector.broadcast %8 : vector<1x128xf32> to vector<64x128xf32>
    %10 = arith.addf %6, %9 : vector<64x128xf32>
    %cst_10 = arith.constant 0.000000e+00 : f32
    %11 = vector.broadcast %cst_10 : f32 to vector<64x128xf32>
    %12 = arith.maximumf %10, %11 : vector<64x128xf32>
    %c1 = arith.constant 1 : index
    %c0_11 = arith.constant 0 : index
    %c0_12 = arith.constant 0 : index
    %13 = vector.load %arg3[%c1, %c0_11, %c0_12] : memref<3x256x128xf32, #tpu.memory_space<vmem>>, vector<1x256x128xf32>
    %14 = vector.shape_cast %13 : vector<1x256x128xf32> to vector<256x128xf32>
    %cst_13 = arith.constant dense<0.000000e+00> : vector<64x128xf32>
    %15 = tpu.matmul %0, %12, %cst_13 {dimension_numbers = #tpu.dot_dimension_numbers<[1], [0], [0], [1], [0, 0, 1, 1], [], []>} : vector<64x64xf32>, vector<64x128xf32>, vector<64x128xf32> -> vector<64x128xf32>
    %16 = tpu.concatenate %12, %15 in 1 : vector<64x128xf32>, vector<64x128xf32> -> vector<64x256xf32>
    %cst_14 = arith.constant dense<0.000000e+00> : vector<64x128xf32>
    %17 = tpu.matmul %16, %14, %cst_14 {dimension_numbers = #tpu.dot_dimension_numbers<[1], [0], [0], [1], [0, 0, 1, 1], [], []>} : vector<64x256xf32>, vector<256x128xf32>, vector<64x128xf32> -> vector<64x128xf32>
    %c1_15 = arith.constant 1 : index
    %c0_16 = arith.constant 0 : index
    %c0_17 = arith.constant 0 : index
    %18 = vector.load %arg4[%c1_15, %c0_16, %c0_17] : memref<3x1x128xf32, #tpu.memory_space<vmem>>, vector<1x1x128xf32>
    %19 = vector.shape_cast %18 : vector<1x1x128xf32> to vector<1x128xf32>
    %20 = vector.broadcast %19 : vector<1x128xf32> to vector<64x128xf32>
    %21 = arith.addf %17, %20 : vector<64x128xf32>
    %cst_18 = arith.constant 0.000000e+00 : f32
    %22 = vector.broadcast %cst_18 : f32 to vector<64x128xf32>
    %23 = arith.maximumf %21, %22 : vector<64x128xf32>
    %c2 = arith.constant 2 : index
    %c0_19 = arith.constant 0 : index
    %c0_20 = arith.constant 0 : index
    %24 = vector.load %arg3[%c2, %c0_19, %c0_20] : memref<3x256x128xf32, #tpu.memory_space<vmem>>, vector<1x256x128xf32>
    %25 = vector.shape_cast %24 : vector<1x256x128xf32> to vector<256x128xf32>
    %cst_21 = arith.constant dense<0.000000e+00> : vector<64x128xf32>
    %26 = tpu.matmul %0, %23, %cst_21 {dimension_numbers = #tpu.dot_dimension_numbers<[1], [0], [0], [1], [0, 0, 1, 1], [], []>} : vector<64x64xf32>, vector<64x128xf32>, vector<64x128xf32> -> vector<64x128xf32>
    %27 = tpu.concatenate %23, %26 in 1 : vector<64x128xf32>, vector<64x128xf32> -> vector<64x256xf32>
    %cst_22 = arith.constant dense<0.000000e+00> : vector<64x128xf32>
    %28 = tpu.matmul %27, %25, %cst_22 {dimension_numbers = #tpu.dot_dimension_numbers<[1], [0], [0], [1], [0, 0, 1, 1], [], []>} : vector<64x256xf32>, vector<256x128xf32>, vector<64x128xf32> -> vector<64x128xf32>
    %c2_23 = arith.constant 2 : index
    %c0_24 = arith.constant 0 : index
    %c0_25 = arith.constant 0 : index
    %29 = vector.load %arg4[%c2_23, %c0_24, %c0_25] : memref<3x1x128xf32, #tpu.memory_space<vmem>>, vector<1x1x128xf32>
    %30 = vector.shape_cast %29 : vector<1x1x128xf32> to vector<1x128xf32>
    %31 = vector.broadcast %30 : vector<1x128xf32> to vector<64x128xf32>
    %32 = arith.addf %28, %31 : vector<64x128xf32>
    %c0_26 = arith.constant 0 : index
    %c0_27 = arith.constant 0 : index
    %33 = vector.load %arg5[%c0_26, %c0_27] : memref<64x128xf32, #tpu.memory_space<vmem>>, vector<64x128xf32>
    tpu.vector_store %arg5[%c0_26, %c0_27], %32 {strides = array<i32>} : memref<64x128xf32, #tpu.memory_space<vmem>>, vector<64x128xf32>,
    return
  }
  func.func @transform_0(%arg0: i32) -> (i32, i32) {
    %c0_i32 = arith.constant 0 : i32
    %c0_i32_0 = arith.constant 0 : i32
    %c0_i32_1 = arith.constant 0 : i32
    return %c0_i32, %c0_i32_0 : i32, i32
  }
  func.func @transform_1(%arg0: i32) -> (i32, i32) {
    %c0_i32 = arith.constant 0 : i32
    %c0_i32_0 = arith.constant 0 : i32
    %c0_i32_1 = arith.constant 0 : i32
    return %c0_i32, %c0_i32_0 : i32, i32
  }
  func.func @transform_2(%arg0: i32) -> (i32, i32, i32) {
    %c0_i32 = arith.constant 0 : i32
    %c0_i32_0 = arith.constant 0 : i32
    %c0_i32_1 = arith.constant 0 : i32
    %c0_i32_2 = arith.constant 0 : i32
    return %c0_i32, %c0_i32_0, %c0_i32_1 : i32, i32, i32
  }
  func.func @transform_3(%arg0: i32) -> (i32, i32, i32) {
    %c0_i32 = arith.constant 0 : i32
    %c0_i32_0 = arith.constant 0 : i32
    %c0_i32_1 = arith.constant 0 : i32
    %c0_i32_2 = arith.constant 0 : i32
    return %c0_i32, %c0_i32_0, %c0_i32_1 : i32, i32, i32
  }
  func.func @transform_4(%arg0: i32) -> (i32, i32) {
    %c0_i32 = arith.constant 0 : i32
    %c0_i32_0 = arith.constant 0 : i32
    %c0_i32_1 = arith.constant 0 : i32
    return %c0_i32, %c0_i32_0 : i32, i32
  }
}

</mosaic_0001>

<llo_original>
// kernel: tpu_custom_call.1
$region0: #{tpu_custom_call.1}
  #allocation0 [shape = 'u32[]', space=smem, size = 0x4, offset = 0x4, fixed_abs, tag = 'smem constant byte address 0x4 - core index']
  #allocation1 [shape = 'u32[144,128]{1,0:T(1,128)}', space=vmem, size = 0x12000, scoped, tag = 'internal scratch']
  %s0 = inlined_call_operand.hbm [shape: f32[64,128], index: 0, kind: input, shape index: {}]
  %s1 = inlined_call_operand.hbm [shape: f32[64,64], index: 1, kind: input, shape index: {}]
  %s2 = inlined_call_operand.hbm [shape: f32[3,256,128], index: 2, kind: input, shape index: {}]
  %s3 = inlined_call_operand.vmem [shape: f32[3,1,128], index: 3, kind: input, shape index: {}]
  %s4 = inlined_call_operand.hbm [shape: f32[64,128], index: 4, kind: output, shape index: {}]
  %s5 = sld [smem:[#allocation0]]
  $region38: #{tpu_custom_call.1} parent=0
    _
  %s7 = ssub.s32 1, %s5
  %s8 = scalar_select 0, %s7, %s5
  $region1: #{tpu_custom_call.1} parent=0
    #allocation2 [shape = 'u8[32768]{0}', space=vmem, size = 0x8000, scoped, tag = 'input window, operand 0, single buffered']
    #allocation3 [shape = 's32[1]{0}', space=sflag, size = 0x4, scoped, tag = 'scoped memory for tpu_custom_call.1']
    #allocation4 [shape = 's32[1]{0}', space=sflag, size = 0x4, scoped, tag = 'scoped memory for tpu_custom_call.1']
    #allocation5 [shape = 'u8[32768]{0}', space=vmem, size = 0x8000, scoped, tag = 'input window, operand 1, single buffered']
    #allocation6 [shape = 's32[1]{0}', space=sflag, size = 0x4, scoped, tag = 'scoped memory for tpu_custom_call.1']
    #allocation7 [shape = 'u8[393216]{0}', space=vmem, size = 0x60000, scoped, tag = 'input window, operand 2, single buffered']
    #allocation8 [shape = 'u8[32768]{0}', space=vmem, size = 0x8000, scoped, tag = 'output window, operand 0, single buffered']
    %9 = vsyncpa [#allocation3], 0
    %10 = vsyncpa [#allocation6], 0
    %11 = vsyncpa [#allocation4], 0
    // Predicated region
    $region2: #{tpu_custom_call.1} parent=1 // pred_check
      _
    $region3: #{tpu_custom_call.1} parent=1 // pred_check_branch
      %13 = sbr.rel (0) target = $region5
    $region4: #{tpu_custom_call.1} parent=1 // pred_region
      %s15 = ssub.s32 1024, 1024
      %16 = vsyncadd [#allocation3], %s15
      %s17 = sshll.u32 [#allocation2], 4
      %s18 = int_to_ptr.vmem [resolvable:$true] %s17
      %23 = dma.hbm_to_vmem [thread:$0]  %s0, 1024, %s18, [#allocation3], 128, 128, 8
    $region5: #{tpu_custom_call.1} parent=1 // pred_fallthru
      _
    // Predicated region
    $region6: #{tpu_custom_call.1} parent=1 // pred_check
      _
    $region7: #{tpu_custom_call.1} parent=1 // pred_check_branch
      %25 = sbr.rel (0) target = $region9
    $region8: #{tpu_custom_call.1} parent=1 // pred_region
      %s27 = ssub.s32 1024, 1024
      %28 = vsyncadd [#allocation6], %s27
      %s29 = sshll.u32 [#allocation5], 4
      %s30 = int_to_ptr.vmem [resolvable:$true] %s29
      %35 = dma.hbm_to_vmem [thread:$0]  %s1, 1024, %s30, [#allocation6], 128, 128, 8
    $region9: #{tpu_custom_call.1} parent=1 // pred_fallthru
      _
    // Predicated region
    $region10: #{tpu_custom_call.1} parent=1 // pred_check
      _
    $region11: #{tpu_custom_call.1} parent=1 // pred_check_branch
      %37 = sbr.rel (0) target = $region13
    $region12: #{tpu_custom_call.1} parent=1 // pred_region
      %s39 = ssub.s32 12288, 12288
      %40 = vsyncadd [#allocation6], %s39
      %s41 = sshll.u32 [#allocation7], 4
      %s42 = int_to_ptr.vmem [resolvable:$true] %s41
      %47 = dma.hbm_to_vmem [thread:$0]  %s2, 12288, %s42, [#allocation6], 128, 128, 8
    $region13: #{tpu_custom_call.1} parent=1 // pred_fallthru
      _
    // Predicated region
    $region14: #{tpu_custom_call.1} parent=1 // pred_check
      _
    $region15: #{tpu_custom_call.1} parent=1 // pred_check_branch
      %49 = sbr.rel (0) target = $region17
    $region16: #{tpu_custom_call.1} parent=1 // pred_region
      _
    $region17: #{tpu_custom_call.1} parent=1 // pred_fallthru
      _
    // Predicated region
    $region18: #{tpu_custom_call.1} parent=1 // pred_check
      _
    $region19: #{tpu_custom_call.1} parent=1 // pred_check_branch
      %51 = sbr.rel (0) target = $region21
    $region20: #{tpu_custom_call.1} parent=1 // pred_region
      %52 = dma.done [#allocation3], 1024
    $region21: #{tpu_custom_call.1} parent=1 // pred_fallthru
      _
    // Predicated region
    $region22: #{tpu_custom_call.1} parent=1 // pred_check
      _
    $region23: #{tpu_custom_call.1} parent=1 // pred_check_branch
      %54 = sbr.rel (0) target = $region25
    $region24: #{tpu_custom_call.1} parent=1 // pred_region
      %55 = dma.done [#allocation6], 1024
    $region25: #{tpu_custom_call.1} parent=1 // pred_fallthru
      _
    // Predicated region
    $region26: #{tpu_custom_call.1} parent=1 // pred_check
      _
    $region27: #{tpu_custom_call.1} parent=1 // pred_check_branch
      %57 = sbr.rel (0) target = $region29
    $region28: #{tpu_custom_call.1} parent=1 // pred_region
      %58 = dma.done [#allocation6], 12288
    $region29: #{tpu_custom_call.1} parent=1 // pred_fallthru
      _
    %v59 = vld [vmem:[#allocation5] sm:$0xff]
    %v60 = vld [vmem:[#allocation5 + $0x8] sm:$0xff]
    %v61 = vld [vmem:[#allocation5 + $0x10] sm:$0xff]
    %v62 = vld [vmem:[#allocation5 + $0x18] sm:$0xff]
    %v63 = vld [vmem:[#allocation5 + $0x20] sm:$0xff]
    %v64 = vld [vmem:[#allocation5 + $0x28] sm:$0xff]
    %v65 = vld [vmem:[#allocation5 + $0x30] sm:$0xff]
    %v66 = vld [vmem:[#allocation5 + $0x38] sm:$0xff]
    %v67 = vld [vmem:[#allocation2] sm:$0xff]
    %v68 = vld [vmem:[#allocation2 + $0x8] sm:$0xff]
    %v69 = vld [vmem:[#allocation2 + $0x10] sm:$0xff]
    %v70 = vld [vmem:[#allocation2 + $0x18] sm:$0xff]
    %v71 = vld [vmem:[#allocation2 + $0x20] sm:$0xff]
    %v72 = vld [vmem:[#allocation2 + $0x28] sm:$0xff]
    %v73 = vld [vmem:[#allocation2 + $0x30] sm:$0xff]
    %v74 = vld [vmem:[#allocation2 + $0x38] sm:$0xff]
    %v75 = vld [vmem:[#allocation7] sm:$0xff]
    %v76 = vld [vmem:[#allocation7 + $0x8] sm:$0xff]
    %v77 = vld [vmem:[#allocation7 + $0x10] sm:$0xff]
    %v78 = vld [vmem:[#allocation7 + $0x18] sm:$0xff]
    %v79 = vld [vmem:[#allocation7 + $0x20] sm:$0xff]
    %v80 = vld [vmem:[#allocation7 + $0x28] sm:$0xff]
    %v81 = vld [vmem:[#allocation7 + $0x30] sm:$0xff]
    %v82 = vld [vmem:[#allocation7 + $0x38] sm:$0xff]
    %v83 = vld [vmem:[#allocation7 + $0x40] sm:$0xff]
    %v84 = vld [vmem:[#allocation7 + $0x48] sm:$0xff]
    %v85 = vld [vmem:[#allocation7 + $0x50] sm:$0xff]
    %v86 = vld [vmem:[#allocation7 + $0x58] sm:$0xff]
    %v87 = vld [vmem:[#allocation7 + $0x60] sm:$0xff]
    %v88 = vld [vmem:[#allocation7 + $0x68] sm:$0xff]
    %v89 = vld [vmem:[#allocation7 + $0x70] sm:$0xff]
    %v90 = vld [vmem:[#allocation7 + $0x78] sm:$0xff]
    %v91 = vld [vmem:[#allocation7 + $0x80] sm:$0xff]
    %v92 = vld [vmem:[#allocation7 + $0x88] sm:$0xff]
    %v93 = vld [vmem:[#allocation7 + $0x90] sm:$0xff]
    %v94 = vld [vmem:[#allocation7 + $0x98] sm:$0xff]
    %v95 = vld [vmem:[#allocation7 + $0xa0] sm:$0xff]
    %v96 = vld [vmem:[#allocation7 + $0xa8] sm:$0xff]
    %v97 = vld [vmem:[#allocation7 + $0xb0] sm:$0xff]
    %v98 = vld [vmem:[#allocation7 + $0xb8] sm:$0xff]
    %v99 = vld [vmem:[#allocation7 + $0xc0] sm:$0xff]
    %v100 = vld [vmem:[#allocation7 + $0xc8] sm:$0xff]
    %v101 = vld [vmem:[#allocation7 + $0xd0] sm:$0xff]
    %v102 = vld [vmem:[#allocation7 + $0xd8] sm:$0xff]
    %v103 = vld [vmem:[#allocation7 + $0xe0] sm:$0xff]
    %v104 = vld [vmem:[#allocation7 + $0xe8] sm:$0xff]
    %v105 = vld [vmem:[#allocation7 + $0xf0] sm:$0xff]
    %v106 = vld [vmem:[#allocation7 + $0xf8] sm:$0xff]
    %vm107 = vcmask 523264
    %v109 = vsel %vm107, %v59, 0
    %v112 = vsel %vm107, %v60, 0
    %v115 = vsel %vm107, %v61, 0
    %v118 = vsel %vm107, %v62, 0
    %v121 = vsel %vm107, %v63, 0
    %v124 = vsel %vm107, %v64, 0
    %v127 = vsel %vm107, %v65, 0
    %v130 = vsel %vm107, %v66, 0
    %132 = vmatprep.subr.mxu0 0.0
    %133 = vmatpush1.msra.mxu0 %v67
    %134 = vmatprep.subr.mxu0 0.0
    %135 = vmatpush1.msra.mxu0 %v68
    %136 = vmatprep.subr.mxu0 0.0
    %137 = vmatpush1.msra.mxu0 %v69
    %138 = vmatprep.subr.mxu0 0.0
    %139 = vmatpush1.msra.mxu0 %v70
    %140 = vmatprep.subr.mxu0 0.0
    %141 = vmatpush1.msra.mxu0 %v71
    %142 = vmatprep.subr.mxu0 0.0
    %143 = vmatpush1.msra.mxu0 %v72
    %144 = vmatprep.subr.mxu0 0.0
    %145 = vmatpush1.msra.mxu0 %v73
    %146 = vmatprep.subr.mxu0 0.0
    %147 = vmatpush1.msra.mxu0 %v74
    %148 = vmatprep.subr.mxu0 0.0
    %149 = vmatpush1.msra.mxu0 0.0
    %150 = vmatprep.subr.mxu0 0.0
    %151 = vmatpush1.msra.mxu0 0.0
    %152 = vmatprep.subr.mxu0 0.0
    %153 = vmatpush1.msra.mxu0 0.0
    %154 = vmatprep.subr.mxu0 0.0
    %155 = vmatpush1.msra.mxu0 0.0
    %156 = vmatprep.subr.mxu0 0.0
    %157 = vmatpush1.msra.mxu0 0.0
    %158 = vmatprep.subr.mxu0 0.0
    %159 = vmatpush1.msra.mxu0 0.0
    %160 = vmatprep.subr.mxu0 0.0
    %161 = vmatpush1.msra.mxu0 0.0
    %162 = vmatprep.subr.mxu0 0.0
    %163 = vmatpush1.msra.mxu0 0.0
    %164 = vmatprep.subr.mxu0 0.0
    %165 = vmatpush1.msra.mxu0 0.0
    %166 = vmatprep.subr.mxu0 0.0
    %167 = vmatpush1.msra.mxu0 0.0
    %168 = vmatprep.subr.mxu0 0.0
    %169 = vmatpush1.msra.mxu0 0.0
    %170 = vmatprep.subr.mxu0 0.0
    %171 = vmatpush1.msra.mxu0 0.0
    %172 = vmatprep.subr.mxu0 0.0
    %173 = vmatpush1.msra.mxu0 0.0
    %174 = vmatprep.subr.mxu0 0.0
    %175 = vmatpush1.msra.mxu0 0.0
    %176 = vmatprep.subr.mxu0 0.0
    %177 = vmatpush1.msra.mxu0 0.0
    %178 = vmatprep.subr.mxu0 0.0
    %179 = vmatpush1.msra.mxu0 0.0
    %180 = vmatprep.subr.mxu0 0.0
    %181 = vmatpush1.msra.mxu0 0.0
    %182 = vmatprep.subr.mxu0 0.0
    %183 = vmatpush1.msra.mxu0 0.0
    %184 = vmatprep.subr.mxu0 0.0
    %185 = vmatpush1.msra.mxu0 0.0
    %186 = vmatprep.subr.mxu0 0.0
    %187 = vmatpush1.msra.mxu0 0.0
    %188 = vmatprep.subr.mxu0 0.0
    %189 = vmatpush1.msra.mxu0 0.0
    %190 = vmatprep.subr.mxu0 0.0
    %191 = vmatpush1.msra.mxu0 0.0
    %192 = vmatprep.subr.mxu0 0.0
    %193 = vmatpush1.msra.mxu0 0.0
    %194 = vmatprep.subr.mxu0 0.0
    %195 = vmatpush1.msra.mxu0 0.0
    %196 = vmatprep.mubr.f32.mxu0 0.0
    %197 = vmatmul.mubr.f32.gmra.mrb[0].mxu0 %v109
    %v198 = vpop.f32.mrb[0].mxu0
    %v199 = vadd.f32 0.0, %v198
    %v200 = vpop.f32.mrb[0].mxu0
    %201 = vmatprep.mubr.f32.mxu0 0.0
    %202 = vmatmul.mubr.f32.gmra.mrb[0].mxu0 %v112
    %v203 = vpop.f32.mrb[0].mxu0
    %v204 = vadd.f32 0.0, %v203
    %v205 = vpop.f32.mrb[0].mxu0
    %206 = vmatprep.mubr.f32.mxu0 0.0
    %207 = vmatmul.mubr.f32.gmra.mrb[0].mxu0 %v115
    %v208 = vpop.f32.mrb[0].mxu0
    %v209 = vadd.f32 0.0, %v208
    %v210 = vpop.f32.mrb[0].mxu0
    %211 = vmatprep.mubr.f32.mxu0 0.0
    %212 = vmatmul.mubr.f32.gmra.mrb[0].mxu0 %v118
    %v213 = vpop.f32.mrb[0].mxu0
    %v214 = vadd.f32 0.0, %v213
    %v215 = vpop.f32.mrb[0].mxu0
    %216 = vmatprep.mubr.f32.mxu0 0.0
    %217 = vmatmul.mubr.f32.gmra.mrb[0].mxu0 %v121
    %v218 = vpop.f32.mrb[0].mxu0
    %v219 = vadd.f32 0.0, %v218
    %v220 = vpop.f32.mrb[0].mxu0
    %221 = vmatprep.mubr.f32.mxu0 0.0
    %222 = vmatmul.mubr.f32.gmra.mrb[0].mxu0 %v124
    %v223 = vpop.f32.mrb[0].mxu0
    %v224 = vadd.f32 0.0, %v223
    %v225 = vpop.f32.mrb[0].mxu0
    %226 = vmatprep.mubr.f32.mxu0 0.0
    %227 = vmatmul.mubr.f32.gmra.mrb[0].mxu0 %v127
    %v228 = vpop.f32.mrb[0].mxu0
    %v229 = vadd.f32 0.0, %v228
    %v230 = vpop.f32.mrb[0].mxu0
    %231 = vmatprep.mubr.f32.mxu0 0.0
    %232 = vmatmul.mubr.f32.gmra.mrb[0].mxu0 %v130
    %v233 = vpop.f32.mrb[0].mxu0
    %v234 = vadd.f32 0.0, %v233
    %v235 = vpop.f32.mrb[0].mxu0
    %236 = vdwg.mxu0
    %v237 = vld [vmem:[%s3] sm:$0x1]
    %v239 = vlaneseq
    %v240 = vshrl.u32 %v239, 7
    %v241 = vsub.s32 0, %v240
    %v242 = vrot.slane %v237, %v241
    %244 = vmatprep.subr.mxu0 0.0
    %245 = vmatpush1.msra.mxu0 %v75
    %246 = vmatprep.subr.mxu0 0.0
    %247 = vmatpush1.msra.mxu0 %v76
    %248 = vmatprep.subr.mxu0 0.0
    %249 = vmatpush1.msra.mxu0 %v77
    %250 = vmatprep.subr.mxu0 0.0
    %251 = vmatpush1.msra.mxu0 %v78
    %252 = vmatprep.subr.mxu0 0.0
    %253 = vmatpush1.msra.mxu0 %v79
    %254 = vmatprep.subr.mxu0 0.0
    %255 = vmatpush1.msra.mxu0 %v80
    %256 = vmatprep.subr.mxu0 0.0
    %257 = vmatpush1.msra.mxu0 %v81
    %258 = vmatprep.subr.mxu0 0.0
    %259 = vmatpush1.msra.mxu0 %v82
    %260 = vmatprep.subr.mxu0 0.0
    %261 = vmatpush1.msra.mxu0 %v83
    %262 = vmatprep.subr.mxu0 0.0
    %263 = vmatpush1.msra.mxu0 %v84
    %264 = vmatprep.subr.mxu0 0.0
    %265 = vmatpush1.msra.mxu0 %v85
    %266 = vmatprep.subr.mxu0 0.0
    %267 = vmatpush1.msra.mxu0 %v86
    %268 = vmatprep.subr.mxu0 0.0
    %269 = vmatpush1.msra.mxu0 %v87
    %270 = vmatprep.subr.mxu0 0.0
    %271 = vmatpush1.msra.mxu0 %v88
    %272 = vmatprep.subr.mxu0 0.0
    %273 = vmatpush1.msra.mxu0 %v89
    %274 = vmatprep.subr.mxu0 0.0
    %275 = vmatpush1.msra.mxu0 %v90
    %276 = vmatprep.subr.mxu0 0.0
    %277 = vmatpush1.msra.mxu0 %v91
    %278 = vmatprep.subr.mxu0 0.0
    %279 = vmatpush1.msra.mxu0 %v92
    %280 = vmatprep.subr.mxu0 0.0
    %281 = vmatpush1.msra.mxu0 %v93
    %282 = vmatprep.subr.mxu0 0.0
    %283 = vmatpush1.msra.mxu0 %v94
    %284 = vmatprep.subr.mxu0 0.0
    %285 = vmatpush1.msra.mxu0 %v95
    %286 = vmatprep.subr.mxu0 0.0
    %287 = vmatpush1.msra.mxu0 %v96
    %288 = vmatprep.subr.mxu0 0.0
    %289 = vmatpush1.msra.mxu0 %v97
    %290 = vmatprep.subr.mxu0 0.0
    %291 = vmatpush1.msra.mxu0 %v98
    %292 = vmatprep.subr.mxu0 0.0
    %293 = vmatpush1.msra.mxu0 %v99
    %294 = vmatprep.subr.mxu0 0.0
    %295 = vmatpush1.msra.mxu0 %v100
    %296 = vmatprep.subr.mxu0 0.0
    %297 = vmatpush1.msra.mxu0 %v101
    %298 = vmatprep.subr.mxu0 0.0
    %299 = vmatpush1.msra.mxu0 %v102
    %300 = vmatprep.subr.mxu0 0.0
    %301 = vmatpush1.msra.mxu0 %v103
    %302 = vmatprep.subr.mxu0 0.0
    %303 = vmatpush1.msra.mxu0 %v104
    %304 = vmatprep.subr.mxu0 0.0
    %305 = vmatpush1.msra.mxu0 %v105
    %306 = vmatprep.subr.mxu0 0.0
    %307 = vmatpush1.msra.mxu0 %v106
    %308 = vmatprep.mubr.f32.mxu0 %v199
    %309 = vmatmul.mubr.f32.gmra.mrb[0].mxu0 %v67
    %v310 = vpop.f32.mrb[0].mxu0
    %v311 = vadd.f32 %v242, %v310
    %v312 = vpop.f32.mrb[0].mxu0
    %313 = vmatprep.mubr.f32.mxu0 %v204
    %314 = vmatmul.mubr.f32.gmra.mrb[0].mxu0 %v68
    %v315 = vpop.f32.mrb[0].mxu0
    %v316 = vadd.f32 %v242, %v315
    %v317 = vpop.f32.mrb[0].mxu0
    %318 = vmatprep.mubr.f32.mxu0 %v209
    %319 = vmatmul.mubr.f32.gmra.mrb[0].mxu0 %v69
    %v320 = vpop.f32.mrb[0].mxu0
    %v321 = vadd.f32 %v242, %v320
    %v322 = vpop.f32.mrb[0].mxu0
    %323 = vmatprep.mubr.f32.mxu0 %v214
    %324 = vmatmul.mubr.f32.gmra.mrb[0].mxu0 %v70
    %v325 = vpop.f32.mrb[0].mxu0
    %v326 = vadd.f32 %v242, %v325
    %v327 = vpop.f32.mrb[0].mxu0
    %328 = vmatprep.mubr.f32.mxu0 %v219
    %329 = vmatmul.mubr.f32.gmra.mrb[0].mxu0 %v71
    %v330 = vpop.f32.mrb[0].mxu0
    %v331 = vadd.f32 %v242, %v330
    %v332 = vpop.f32.mrb[0].mxu0
    %333 = vmatprep.mubr.f32.mxu0 %v224
    %334 = vmatmul.mubr.f32.gmra.mrb[0].mxu0 %v72
    %v335 = vpop.f32.mrb[0].mxu0
    %v336 = vadd.f32 %v242, %v335
    %v337 = vpop.f32.mrb[0].mxu0
    %338 = vmatprep.mubr.f32.mxu0 %v229
    %339 = vmatmul.mubr.f32.gmra.mrb[0].mxu0 %v73
    %v340 = vpop.f32.mrb[0].mxu0
    %v341 = vadd.f32 %v242, %v340
    %v342 = vpop.f32.mrb[0].mxu0
    %343 = vmatprep.mubr.f32.mxu0 %v234
    %344 = vmatmul.mubr.f32.gmra.mrb[0].mxu0 %v74
    %v345 = vpop.f32.mrb[0].mxu0
    %v346 = vadd.f32 %v242, %v345
    %v347 = vpop.f32.mrb[0].mxu0
    %348 = vdwg.mxu0
    %v349 = vmax.f32 %v311, 0.0
    %v350 = vmax.f32 %v316, 0.0
    %v351 = vmax.f32 %v321, 0.0
    %v352 = vmax.f32 %v326, 0.0
    %v353 = vmax.f32 %v331, 0.0
    %v354 = vmax.f32 %v336, 0.0
    %v355 = vmax.f32 %v341, 0.0
    %v356 = vmax.f32 %v346, 0.0
    %s357 = scalar_lea.vmem [#allocation7], 256
    %v358 = vld [vmem:[%s357] sm:$0xff]
    %v359 = vld [vmem:[%s357 + $0x8] sm:$0xff]
    %v360 = vld [vmem:[%s357 + $0x10] sm:$0xff]
    %v361 = vld [vmem:[%s357 + $0x18] sm:$0xff]
    %v362 = vld [vmem:[%s357 + $0x20] sm:$0xff]
    %v363 = vld [vmem:[%s357 + $0x28] sm:$0xff]
    %v364 = vld [vmem:[%s357 + $0x30] sm:$0xff]
    %v365 = vld [vmem:[%s357 + $0x38] sm:$0xff]
    %v366 = vld [vmem:[%s357 + $0x40] sm:$0xff]
    %v367 = vld [vmem:[%s357 + $0x48] sm:$0xff]
    %v368 = vld [vmem:[%s357 + $0x50] sm:$0xff]
    %v369 = vld [vmem:[%s357 + $0x58] sm:$0xff]
    %v370 = vld [vmem:[%s357 + $0x60] sm:$0xff]
    %v371 = vld [vmem:[%s357 + $0x68] sm:$0xff]
    %v372 = vld [vmem:[%s357 + $0x70] sm:$0xff]
    %v373 = vld [vmem:[%s357 + $0x78] sm:$0xff]
    %v374 = vld [vmem:[%s357 + $0x80] sm:$0xff]
    %v375 = vld [vmem:[%s357 + $0x88] sm:$0xff]
    %v376 = vld [vmem:[%s357 + $0x90] sm:$0xff]
    %v377 = vld [vmem:[%s357 + $0x98] sm:$0xff]
    %v378 = vld [vmem:[%s357 + $0xa0] sm:$0xff]
    %v379 = vld [vmem:[%s357 + $0xa8] sm:$0xff]
    %v380 = vld [vmem:[%s357 + $0xb0] sm:$0xff]
    %v381 = vld [vmem:[%s357 + $0xb8] sm:$0xff]
    %v382 = vld [vmem:[%s357 + $0xc0] sm:$0xff]
    %v383 = vld [vmem:[%s357 + $0xc8] sm:$0xff]
    %v384 = vld [vmem:[%s357 + $0xd0] sm:$0xff]
    %v385 = vld [vmem:[%s357 + $0xd8] sm:$0xff]
    %v386 = vld [vmem:[%s357 + $0xe0] sm:$0xff]
    %v387 = vld [vmem:[%s357 + $0xe8] sm:$0xff]
    %v388 = vld [vmem:[%s357 + $0xf0] sm:$0xff]
    %v389 = vld [vmem:[%s357 + $0xf8] sm:$0xff]
    %390 = vmatprep.subr.mxu0 0.0
    %391 = vmatpush1.msra.mxu0 %v349
    %392 = vmatprep.subr.mxu0 0.0
    %393 = vmatpush1.msra.mxu0 %v350
    %394 = vmatprep.subr.mxu0 0.0
    %395 = vmatpush1.msra.mxu0 %v351
    %396 = vmatprep.subr.mxu0 0.0
    %397 = vmatpush1.msra.mxu0 %v352
    %398 = vmatprep.subr.mxu0 0.0
    %399 = vmatpush1.msra.mxu0 %v353
    %400 = vmatprep.subr.mxu0 0.0
    %401 = vmatpush1.msra.mxu0 %v354
    %402 = vmatprep.subr.mxu0 0.0
    %403 = vmatpush1.msra.mxu0 %v355
    %404 = vmatprep.subr.mxu0 0.0
    %405 = vmatpush1.msra.mxu0 %v356
    %406 = vmatprep.subr.mxu0 0.0
    %407 = vmatpush1.msra.mxu0 0.0
    %408 = vmatprep.subr.mxu0 0.0
    %409 = vmatpush1.msra.mxu0 0.0
    %410 = vmatprep.subr.mxu0 0.0
    %411 = vmatpush1.msra.mxu0 0.0
    %412 = vmatprep.subr.mxu0 0.0
    %413 = vmatpush1.msra.mxu0 0.0
    %414 = vmatprep.subr.mxu0 0.0
    %415 = vmatpush1.msra.mxu0 0.0
    %416 = vmatprep.subr.mxu0 0.0
    %417 = vmatpush1.msra.mxu0 0.0
    %418 = vmatprep.subr.mxu0 0.0
    %419 = vmatpush1.msra.mxu0 0.0
    %420 = vmatprep.subr.mxu0 0.0
    %421 = vmatpush1.msra.mxu0 0.0
    %422 = vmatprep.subr.mxu0 0.0
    %423 = vmatpush1.msra.mxu0 0.0
    %424 = vmatprep.subr.mxu0 0.0
    %425 = vmatpush1.msra.mxu0 0.0
    %426 = vmatprep.subr.mxu0 0.0
    %427 = vmatpush1.msra.mxu0 0.0
    %428 = vmatprep.subr.mxu0 0.0
    %429 = vmatpush1.msra.mxu0 0.0
    %430 = vmatprep.subr.mxu0 0.0
    %431 = vmatpush1.msra.mxu0 0.0
    %432 = vmatprep.subr.mxu0 0.0
    %433 = vmatpush1.msra.mxu0 0.0
    %434 = vmatprep.subr.mxu0 0.0
    %435 = vmatpush1.msra.mxu0 0.0
    %436 = vmatprep.subr.mxu0 0.0
    %437 = vmatpush1.msra.mxu0 0.0
    %438 = vmatprep.subr.mxu0 0.0
    %439 = vmatpush1.msra.mxu0 0.0
    %440 = vmatprep.subr.mxu0 0.0
    %441 = vmatpush1.msra.mxu0 0.0
    %442 = vmatprep.subr.mxu0 0.0
    %443 = vmatpush1.msra.mxu0 0.0
    %444 = vmatprep.subr.mxu0 0.0
    %445 = vmatpush1.msra.mxu0 0.0
    %446 = vmatprep.subr.mxu0 0.0
    %447 = vmatpush1.msra.mxu0 0.0
    %448 = vmatprep.subr.mxu0 0.0
    %449 = vmatpush1.msra.mxu0 0.0
    %450 = vmatprep.subr.mxu0 0.0
    %451 = vmatpush1.msra.mxu0 0.0
    %452 = vmatprep.subr.mxu0 0.0
    %453 = vmatpush1.msra.mxu0 0.0
    %454 = vmatprep.mubr.f32.mxu0 0.0
    %455 = vmatmul.mubr.f32.gmra.mrb[0].mxu0 %v109
    %v456 = vpop.f32.mrb[0].mxu0
    %v457 = vadd.f32 0.0, %v456
    %v458 = vpop.f32.mrb[0].mxu0
    %459 = vmatprep.mubr.f32.mxu0 0.0
    %460 = vmatmul.mubr.f32.gmra.mrb[0].mxu0 %v112
    %v461 = vpop.f32.mrb[0].mxu0
    %v462 = vadd.f32 0.0, %v461
    %v463 = vpop.f32.mrb[0].mxu0
    %464 = vmatprep.mubr.f32.mxu0 0.0
    %465 = vmatmul.mubr.f32.gmra.mrb[0].mxu0 %v115
    %v466 = vpop.f32.mrb[0].mxu0
    %v467 = vadd.f32 0.0, %v466
    %v468 = vpop.f32.mrb[0].mxu0
    %469 = vmatprep.mubr.f32.mxu0 0.0
    %470 = vmatmul.mubr.f32.gmra.mrb[0].mxu0 %v118
    %v471 = vpop.f32.mrb[0].mxu0
    %v472 = vadd.f32 0.0, %v471
    %v473 = vpop.f32.mrb[0].mxu0
    %474 = vmatprep.mubr.f32.mxu0 0.0
    %475 = vmatmul.mubr.f32.gmra.mrb[0].mxu0 %v121
    %v476 = vpop.f32.mrb[0].mxu0
    %v477 = vadd.f32 0.0, %v476
    %v478 = vpop.f32.mrb[0].mxu0
    %479 = vmatprep.mubr.f32.mxu0 0.0
    %480 = vmatmul.mubr.f32.gmra.mrb[0].mxu0 %v124
    %v481 = vpop.f32.mrb[0].mxu0
    %v482 = vadd.f32 0.0, %v481
    %v483 = vpop.f32.mrb[0].mxu0
    %484 = vmatprep.mubr.f32.mxu0 0.0
    %485 = vmatmul.mubr.f32.gmra.mrb[0].mxu0 %v127
    %v486 = vpop.f32.mrb[0].mxu0
    %v487 = vadd.f32 0.0, %v486
    %v488 = vpop.f32.mrb[0].mxu0
    %489 = vmatprep.mubr.f32.mxu0 0.0
    %490 = vmatmul.mubr.f32.gmra.mrb[0].mxu0 %v130
    %v491 = vpop.f32.mrb[0].mxu0
    %v492 = vadd.f32 0.0, %v491
    %v493 = vpop.f32.mrb[0].mxu0
    %494 = vdwg.mxu0
    %s495 = scalar_lea.vmem %s3, 1
    %v496 = vld [vmem:[%s495] sm:$0x1]
    %v498 = vlaneseq
    %v499 = vshrl.u32 %v498, 7
    %v500 = vsub.s32 0, %v499
    %v501 = vrot.slane %v496, %v500
    %503 = vmatprep.subr.mxu0 0.0
    %504 = vmatpush1.msra.mxu0 %v358
    %505 = vmatprep.subr.mxu0 0.0
    %506 = vmatpush1.msra.mxu0 %v359
    %507 = vmatprep.subr.mxu0 0.0
    %508 = vmatpush1.msra.mxu0 %v360
    %509 = vmatprep.subr.mxu0 0.0
    %510 = vmatpush1.msra.mxu0 %v361
    %511 = vmatprep.subr.mxu0 0.0
    %512 = vmatpush1.msra.mxu0 %v362
    %513 = vmatprep.subr.mxu0 0.0
    %514 = vmatpush1.msra.mxu0 %v363
    %515 = vmatprep.subr.mxu0 0.0
    %516 = vmatpush1.msra.mxu0 %v364
    %517 = vmatprep.subr.mxu0 0.0
    %518 = vmatpush1.msra.mxu0 %v365
    %519 = vmatprep.subr.mxu0 0.0
    %520 = vmatpush1.msra.mxu0 %v366
    %521 = vmatprep.subr.mxu0 0.0
    %522 = vmatpush1.msra.mxu0 %v367
    %523 = vmatprep.subr.mxu0 0.0
    %524 = vmatpush1.msra.mxu0 %v368
    %525 = vmatprep.subr.mxu0 0.0
    %526 = vmatpush1.msra.mxu0 %v369
    %527 = vmatprep.subr.mxu0 0.0
    %528 = vmatpush1.msra.mxu0 %v370
    %529 = vmatprep.subr.mxu0 0.0
    %530 = vmatpush1.msra.mxu0 %v371
    %531 = vmatprep.subr.mxu0 0.0
    %532 = vmatpush1.msra.mxu0 %v372
    %533 = vmatprep.subr.mxu0 0.0
    %534 = vmatpush1.msra.mxu0 %v373
    %535 = vmatprep.subr.mxu0 0.0
    %536 = vmatpush1.msra.mxu0 %v374
    %537 = vmatprep.subr.mxu0 0.0
    %538 = vmatpush1.msra.mxu0 %v375
    %539 = vmatprep.subr.mxu0 0.0
    %540 = vmatpush1.msra.mxu0 %v376
    %541 = vmatprep.subr.mxu0 0.0
    %542 = vmatpush1.msra.mxu0 %v377
    %543 = vmatprep.subr.mxu0 0.0
    %544 = vmatpush1.msra.mxu0 %v378
    %545 = vmatprep.subr.mxu0 0.0
    %546 = vmatpush1.msra.mxu0 %v379
    %547 = vmatprep.subr.mxu0 0.0
    %548 = vmatpush1.msra.mxu0 %v380
    %549 = vmatprep.subr.mxu0 0.0
    %550 = vmatpush1.msra.mxu0 %v381
    %551 = vmatprep.subr.mxu0 0.0
    %552 = vmatpush1.msra.mxu0 %v382
    %553 = vmatprep.subr.mxu0 0.0
    %554 = vmatpush1.msra.mxu0 %v383
    %555 = vmatprep.subr.mxu0 0.0
    %556 = vmatpush1.msra.mxu0 %v384
    %557 = vmatprep.subr.mxu0 0.0
    %558 = vmatpush1.msra.mxu0 %v385
    %559 = vmatprep.subr.mxu0 0.0
    %560 = vmatpush1.msra.mxu0 %v386
    %561 = vmatprep.subr.mxu0 0.0
    %562 = vmatpush1.msra.mxu0 %v387
    %563 = vmatprep.subr.mxu0 0.0
    %564 = vmatpush1.msra.mxu0 %v388
    %565 = vmatprep.subr.mxu0 0.0
    %566 = vmatpush1.msra.mxu0 %v389
    %567 = vmatprep.mubr.f32.mxu0 %v457
    %568 = vmatmul.mubr.f32.gmra.mrb[0].mxu0 %v349
    %v569 = vpop.f32.mrb[0].mxu0
    %v570 = vadd.f32 %v501, %v569
    %v571 = vpop.f32.mrb[0].mxu0
    %572 = vmatprep.mubr.f32.mxu0 %v462
    %573 = vmatmul.mubr.f32.gmra.mrb[0].mxu0 %v350
    %v574 = vpop.f32.mrb[0].mxu0
    %v575 = vadd.f32 %v501, %v574
    %v576 = vpop.f32.mrb[0].mxu0
    %577 = vmatprep.mubr.f32.mxu0 %v467
    %578 = vmatmul.mubr.f32.gmra.mrb[0].mxu0 %v351
    %v579 = vpop.f32.mrb[0].mxu0
    %v580 = vadd.f32 %v501, %v579
    %v581 = vpop.f32.mrb[0].mxu0
    %582 = vmatprep.mubr.f32.mxu0 %v472
    %583 = vmatmul.mubr.f32.gmra.mrb[0].mxu0 %v352
    %v584 = vpop.f32.mrb[0].mxu0
    %v585 = vadd.f32 %v501, %v584
    %v586 = vpop.f32.mrb[0].mxu0
    %587 = vmatprep.mubr.f32.mxu0 %v477
    %588 = vmatmul.mubr.f32.gmra.mrb[0].mxu0 %v353
    %v589 = vpop.f32.mrb[0].mxu0
    %v590 = vadd.f32 %v501, %v589
    %v591 = vpop.f32.mrb[0].mxu0
    %592 = vmatprep.mubr.f32.mxu0 %v482
    %593 = vmatmul.mubr.f32.gmra.mrb[0].mxu0 %v354
    %v594 = vpop.f32.mrb[0].mxu0
    %v595 = vadd.f32 %v501, %v594
    %v596 = vpop.f32.mrb[0].mxu0
    %597 = vmatprep.mubr.f32.mxu0 %v487
    %598 = vmatmul.mubr.f32.gmra.mrb[0].mxu0 %v355
    %v599 = vpop.f32.mrb[0].mxu0
    %v600 = vadd.f32 %v501, %v599
    %v601 = vpop.f32.mrb[0].mxu0
    %602 = vmatprep.mubr.f32.mxu0 %v492
    %603 = vmatmul.mubr.f32.gmra.mrb[0].mxu0 %v356
    %v604 = vpop.f32.mrb[0].mxu0
    %v605 = vadd.f32 %v501, %v604
    %v606 = vpop.f32.mrb[0].mxu0
    %607 = vdwg.mxu0
    %v608 = vmax.f32 %v570, 0.0
    %v609 = vmax.f32 %v575, 0.0
    %v610 = vmax.f32 %v580, 0.0
    %v611 = vmax.f32 %v585, 0.0
    %v612 = vmax.f32 %v590, 0.0
    %v613 = vmax.f32 %v595, 0.0
    %v614 = vmax.f32 %v600, 0.0
    %v615 = vmax.f32 %v605, 0.0
    %s616 = scalar_lea.vmem [#allocation7], 512
    %v617 = vld [vmem:[%s616] sm:$0xff]
    %v618 = vld [vmem:[%s616 + $0x8] sm:$0xff]
    %v619 = vld [vmem:[%s616 + $0x10] sm:$0xff]
    %v620 = vld [vmem:[%s616 + $0x18] sm:$0xff]
    %v621 = vld [vmem:[%s616 + $0x20] sm:$0xff]
    %v622 = vld [vmem:[%s616 + $0x28] sm:$0xff]
    %v623 = vld [vmem:[%s616 + $0x30] sm:$0xff]
    %v624 = vld [vmem:[%s616 + $0x38] sm:$0xff]
    %v625 = vld [vmem:[%s616 + $0x40] sm:$0xff]
    %v626 = vld [vmem:[%s616 + $0x48] sm:$0xff]
    %v627 = vld [vmem:[%s616 + $0x50] sm:$0xff]
    %v628 = vld [vmem:[%s616 + $0x58] sm:$0xff]
    %v629 = vld [vmem:[%s616 + $0x60] sm:$0xff]
    %v630 = vld [vmem:[%s616 + $0x68] sm:$0xff]
    %v631 = vld [vmem:[%s616 + $0x70] sm:$0xff]
    %v632 = vld [vmem:[%s616 + $0x78] sm:$0xff]
    %v633 = vld [vmem:[%s616 + $0x80] sm:$0xff]
    %v634 = vld [vmem:[%s616 + $0x88] sm:$0xff]
    %v635 = vld [vmem:[%s616 + $0x90] sm:$0xff]
    %v636 = vld [vmem:[%s616 + $0x98] sm:$0xff]
    %v637 = vld [vmem:[%s616 + $0xa0] sm:$0xff]
    %v638 = vld [vmem:[%s616 + $0xa8] sm:$0xff]
    %v639 = vld [vmem:[%s616 + $0xb0] sm:$0xff]
    %v640 = vld [vmem:[%s616 + $0xb8] sm:$0xff]
    %v641 = vld [vmem:[%s616 + $0xc0] sm:$0xff]
    %v642 = vld [vmem:[%s616 + $0xc8] sm:$0xff]
    %v643 = vld [vmem:[%s616 + $0xd0] sm:$0xff]
    %v644 = vld [vmem:[%s616 + $0xd8] sm:$0xff]
    %v645 = vld [vmem:[%s616 + $0xe0] sm:$0xff]
    %v646 = vld [vmem:[%s616 + $0xe8] sm:$0xff]
    %v647 = vld [vmem:[%s616 + $0xf0] sm:$0xff]
    %v648 = vld [vmem:[%s616 + $0xf8] sm:$0xff]
    %649 = vmatprep.subr.mxu0 0.0
    %650 = vmatpush1.msra.mxu0 %v608
    %651 = vmatprep.subr.mxu0 0.0
    %652 = vmatpush1.msra.mxu0 %v609
    %653 = vmatprep.subr.mxu0 0.0
    %654 = vmatpush1.msra.mxu0 %v610
    %655 = vmatprep.subr.mxu0 0.0
    %656 = vmatpush1.msra.mxu0 %v611
    %657 = vmatprep.subr.mxu0 0.0
    %658 = vmatpush1.msra.mxu0 %v612
    %659 = vmatprep.subr.mxu0 0.0
    %660 = vmatpush1.msra.mxu0 %v613
    %661 = vmatprep.subr.mxu0 0.0
    %662 = vmatpush1.msra.mxu0 %v614
    %663 = vmatprep.subr.mxu0 0.0
    %664 = vmatpush1.msra.mxu0 %v615
    %665 = vmatprep.subr.mxu0 0.0
    %666 = vmatpush1.msra.mxu0 0.0
    %667 = vmatprep.subr.mxu0 0.0
    %668 = vmatpush1.msra.mxu0 0.0
    %669 = vmatprep.subr.mxu0 0.0
    %670 = vmatpush1.msra.mxu0 0.0
    %671 = vmatprep.subr.mxu0 0.0
    %672 = vmatpush1.msra.mxu0 0.0
    %673 = vmatprep.subr.mxu0 0.0
    %674 = vmatpush1.msra.mxu0 0.0
    %675 = vmatprep.subr.mxu0 0.0
    %676 = vmatpush1.msra.mxu0 0.0
    %677 = vmatprep.subr.mxu0 0.0
    %678 = vmatpush1.msra.mxu0 0.0
    %679 = vmatprep.subr.mxu0 0.0
    %680 = vmatpush1.msra.mxu0 0.0
    %681 = vmatprep.subr.mxu0 0.0
    %682 = vmatpush1.msra.mxu0 0.0
    %683 = vmatprep.subr.mxu0 0.0
    %684 = vmatpush1.msra.mxu0 0.0
    %685 = vmatprep.subr.mxu0 0.0
    %686 = vmatpush1.msra.mxu0 0.0
    %687 = vmatprep.subr.mxu0 0.0
    %688 = vmatpush1.msra.mxu0 0.0
    %689 = vmatprep.subr.mxu0 0.0
    %690 = vmatpush1.msra.mxu0 0.0
    %691 = vmatprep.subr.mxu0 0.0
    %692 = vmatpush1.msra.mxu0 0.0
    %693 = vmatprep.subr.mxu0 0.0
    %694 = vmatpush1.msra.mxu0 0.0
    %695 = vmatprep.subr.mxu0 0.0
    %696 = vmatpush1.msra.mxu0 0.0
    %697 = vmatprep.subr.mxu0 0.0
    %698 = vmatpush1.msra.mxu0 0.0
    %699 = vmatprep.subr.mxu0 0.0
    %700 = vmatpush1.msra.mxu0 0.0
    %701 = vmatprep.subr.mxu0 0.0
    %702 = vmatpush1.msra.mxu0 0.0
    %703 = vmatprep.subr.mxu0 0.0
    %704 = vmatpush1.msra.mxu0 0.0
    %705 = vmatprep.subr.mxu0 0.0
    %706 = vmatpush1.msra.mxu0 0.0
    %707 = vmatprep.subr.mxu0 0.0
    %708 = vmatpush1.msra.mxu0 0.0
    %709 = vmatprep.subr.mxu0 0.0
    %710 = vmatpush1.msra.mxu0 0.0
    %711 = vmatprep.subr.mxu0 0.0
    %712 = vmatpush1.msra.mxu0 0.0
    %713 = vmatprep.mubr.f32.mxu0 0.0
    %714 = vmatmul.mubr.f32.gmra.mrb[0].mxu0 %v109
    %v715 = vpop.f32.mrb[0].mxu0
    %v716 = vadd.f32 0.0, %v715
    %v717 = vpop.f32.mrb[0].mxu0
    %718 = vmatprep.mubr.f32.mxu0 0.0
    %719 = vmatmul.mubr.f32.gmra.mrb[0].mxu0 %v112
    %v720 = vpop.f32.mrb[0].mxu0
    %v721 = vadd.f32 0.0, %v720
    %v722 = vpop.f32.mrb[0].mxu0
    %723 = vmatprep.mubr.f32.mxu0 0.0
    %724 = vmatmul.mubr.f32.gmra.mrb[0].mxu0 %v115
    %v725 = vpop.f32.mrb[0].mxu0
    %v726 = vadd.f32 0.0, %v725
    %v727 = vpop.f32.mrb[0].mxu0
    %728 = vmatprep.mubr.f32.mxu0 0.0
    %729 = vmatmul.mubr.f32.gmra.mrb[0].mxu0 %v118
    %v730 = vpop.f32.mrb[0].mxu0
    %v731 = vadd.f32 0.0, %v730
    %v732 = vpop.f32.mrb[0].mxu0
    %733 = vmatprep.mubr.f32.mxu0 0.0
    %734 = vmatmul.mubr.f32.gmra.mrb[0].mxu0 %v121
    %v735 = vpop.f32.mrb[0].mxu0
    %v736 = vadd.f32 0.0, %v735
    %v737 = vpop.f32.mrb[0].mxu0
    %738 = vmatprep.mubr.f32.mxu0 0.0
    %739 = vmatmul.mubr.f32.gmra.mrb[0].mxu0 %v124
    %v740 = vpop.f32.mrb[0].mxu0
    %v741 = vadd.f32 0.0, %v740
    %v742 = vpop.f32.mrb[0].mxu0
    %743 = vmatprep.mubr.f32.mxu0 0.0
    %744 = vmatmul.mubr.f32.gmra.mrb[0].mxu0 %v127
    %v745 = vpop.f32.mrb[0].mxu0
    %v746 = vadd.f32 0.0, %v745
    %v747 = vpop.f32.mrb[0].mxu0
    %748 = vmatprep.mubr.f32.mxu0 0.0
    %749 = vmatmul.mubr.f32.gmra.mrb[0].mxu0 %v130
    %v750 = vpop.f32.mrb[0].mxu0
    %v751 = vadd.f32 0.0, %v750
    %v752 = vpop.f32.mrb[0].mxu0
    %753 = vdwg.mxu0
    %s754 = scalar_lea.vmem %s3, 2
    %v755 = vld [vmem:[%s754] sm:$0x1]
    %v757 = vlaneseq
    %v758 = vshrl.u32 %v757, 7
    %v759 = vsub.s32 0, %v758
    %v760 = vrot.slane %v755, %v759
    %762 = vmatprep.subr.mxu0 0.0
    %763 = vmatpush1.msra.mxu0 %v617
    %764 = vmatprep.subr.mxu0 0.0
    %765 = vmatpush1.msra.mxu0 %v618
    %766 = vmatprep.subr.mxu0 0.0
    %767 = vmatpush1.msra.mxu0 %v619
    %768 = vmatprep.subr.mxu0 0.0
    %769 = vmatpush1.msra.mxu0 %v620
    %770 = vmatprep.subr.mxu0 0.0
    %771 = vmatpush1.msra.mxu0 %v621
    %772 = vmatprep.subr.mxu0 0.0
    %773 = vmatpush1.msra.mxu0 %v622
    %774 = vmatprep.subr.mxu0 0.0
    %775 = vmatpush1.msra.mxu0 %v623
    %776 = vmatprep.subr.mxu0 0.0
    %777 = vmatpush1.msra.mxu0 %v624
    %778 = vmatprep.subr.mxu0 0.0
    %779 = vmatpush1.msra.mxu0 %v625
    %780 = vmatprep.subr.mxu0 0.0
    %781 = vmatpush1.msra.mxu0 %v626
    %782 = vmatprep.subr.mxu0 0.0
    %783 = vmatpush1.msra.mxu0 %v627
    %784 = vmatprep.subr.mxu0 0.0
    %785 = vmatpush1.msra.mxu0 %v628
    %786 = vmatprep.subr.mxu0 0.0
    %787 = vmatpush1.msra.mxu0 %v629
    %788 = vmatprep.subr.mxu0 0.0
    %789 = vmatpush1.msra.mxu0 %v630
    %790 = vmatprep.subr.mxu0 0.0
    %791 = vmatpush1.msra.mxu0 %v631
    %792 = vmatprep.subr.mxu0 0.0
    %793 = vmatpush1.msra.mxu0 %v632
    %794 = vmatprep.subr.mxu0 0.0
    %795 = vmatpush1.msra.mxu0 %v633
    %796 = vmatprep.subr.mxu0 0.0
    %797 = vmatpush1.msra.mxu0 %v634
    %798 = vmatprep.subr.mxu0 0.0
    %799 = vmatpush1.msra.mxu0 %v635
    %800 = vmatprep.subr.mxu0 0.0
    %801 = vmatpush1.msra.mxu0 %v636
    %802 = vmatprep.subr.mxu0 0.0
    %803 = vmatpush1.msra.mxu0 %v637
    %804 = vmatprep.subr.mxu0 0.0
    %805 = vmatpush1.msra.mxu0 %v638
    %806 = vmatprep.subr.mxu0 0.0
    %807 = vmatpush1.msra.mxu0 %v639
    %808 = vmatprep.subr.mxu0 0.0
    %809 = vmatpush1.msra.mxu0 %v640
    %810 = vmatprep.subr.mxu0 0.0
    %811 = vmatpush1.msra.mxu0 %v641
    %812 = vmatprep.subr.mxu0 0.0
    %813 = vmatpush1.msra.mxu0 %v642
    %814 = vmatprep.subr.mxu0 0.0
    %815 = vmatpush1.msra.mxu0 %v643
    %816 = vmatprep.subr.mxu0 0.0
    %817 = vmatpush1.msra.mxu0 %v644
    %818 = vmatprep.subr.mxu0 0.0
    %819 = vmatpush1.msra.mxu0 %v645
    %820 = vmatprep.subr.mxu0 0.0
    %821 = vmatpush1.msra.mxu0 %v646
    %822 = vmatprep.subr.mxu0 0.0
    %823 = vmatpush1.msra.mxu0 %v647
    %824 = vmatprep.subr.mxu0 0.0
    %825 = vmatpush1.msra.mxu0 %v648
    %826 = vmatprep.mubr.f32.mxu0 %v716
    %827 = vmatmul.mubr.f32.gmra.mrb[0].mxu0 %v608
    %v828 = vpop.f32.mrb[0].mxu0
    %v829 = vadd.f32 %v760, %v828
    %v830 = vpop.f32.mrb[0].mxu0
    %831 = vmatprep.mubr.f32.mxu0 %v721
    %832 = vmatmul.mubr.f32.gmra.mrb[0].mxu0 %v609
    %v833 = vpop.f32.mrb[0].mxu0
    %v834 = vadd.f32 %v760, %v833
    %v835 = vpop.f32.mrb[0].mxu0
    %836 = vmatprep.mubr.f32.mxu0 %v726
    %837 = vmatmul.mubr.f32.gmra.mrb[0].mxu0 %v610
    %v838 = vpop.f32.mrb[0].mxu0
    %v839 = vadd.f32 %v760, %v838
    %v840 = vpop.f32.mrb[0].mxu0
    %841 = vmatprep.mubr.f32.mxu0 %v731
    %842 = vmatmul.mubr.f32.gmra.mrb[0].mxu0 %v611
    %v843 = vpop.f32.mrb[0].mxu0
    %v844 = vadd.f32 %v760, %v843
    %v845 = vpop.f32.mrb[0].mxu0
    %846 = vmatprep.mubr.f32.mxu0 %v736
    %847 = vmatmul.mubr.f32.gmra.mrb[0].mxu0 %v612
    %v848 = vpop.f32.mrb[0].mxu0
    %v849 = vadd.f32 %v760, %v848
    %v850 = vpop.f32.mrb[0].mxu0
    %851 = vmatprep.mubr.f32.mxu0 %v741
    %852 = vmatmul.mubr.f32.gmra.mrb[0].mxu0 %v613
    %v853 = vpop.f32.mrb[0].mxu0
    %v854 = vadd.f32 %v760, %v853
    %v855 = vpop.f32.mrb[0].mxu0
    %856 = vmatprep.mubr.f32.mxu0 %v746
    %857 = vmatmul.mubr.f32.gmra.mrb[0].mxu0 %v614
    %v858 = vpop.f32.mrb[0].mxu0
    %v859 = vadd.f32 %v760, %v858
    %v860 = vpop.f32.mrb[0].mxu0
    %861 = vmatprep.mubr.f32.mxu0 %v751
    %862 = vmatmul.mubr.f32.gmra.mrb[0].mxu0 %v615
    %v863 = vpop.f32.mrb[0].mxu0
    %v864 = vadd.f32 %v760, %v863
    %v865 = vpop.f32.mrb[0].mxu0
    %866 = vdwg.mxu0
    %867 = vst [vmem:[#allocation8] sm:$0xff] %v829
    %868 = vst [vmem:[#allocation8 + $0x8] sm:$0xff] %v834
    %869 = vst [vmem:[#allocation8 + $0x10] sm:$0xff] %v839
    %870 = vst [vmem:[#allocation8 + $0x18] sm:$0xff] %v844
    %871 = vst [vmem:[#allocation8 + $0x20] sm:$0xff] %v849
    %872 = vst [vmem:[#allocation8 + $0x28] sm:$0xff] %v854
    %873 = vst [vmem:[#allocation8 + $0x30] sm:$0xff] %v859
    %874 = vst [vmem:[#allocation8 + $0x38] sm:$0xff] %v864
    // Predicated region
    $region30: #{tpu_custom_call.1} parent=1 // pred_check
      _
    $region31: #{tpu_custom_call.1} parent=1 // pred_check_branch
      %876 = sbr.rel (0) target = $region33
    $region32: #{tpu_custom_call.1} parent=1 // pred_region
      %s878 = ssub.s32 1024, 1024
      %879 = vsyncadd [#allocation4], %s878
      %s880 = sshll.u32 [#allocation8], 4
      %s881 = int_to_ptr.vmem [resolvable:$true] %s880
      %886 = dma.vmem_to_hbm [thread:$0]  %s881, 1024, %s4, [#allocation4], 128, 128, 8
    $region33: #{tpu_custom_call.1} parent=1 // pred_fallthru
      _
    // Predicated region
    $region34: #{tpu_custom_call.1} parent=1 // pred_check
      _
    $region35: #{tpu_custom_call.1} parent=1 // pred_check_branch
      %888 = sbr.rel (0) target = $region37
    $region36: #{tpu_custom_call.1} parent=1 // pred_region
      %889 = dma.done [#allocation4], 1024
    $region37: #{tpu_custom_call.1} parent=1 // pred_fallthru
      _
    %890 = vsyncpa [#allocation3], 1
    %891 = vsyncpa [#allocation6], 1
    %892 = vsyncpa [#allocation4], 1

</llo_original>
